<compile_context>
chip_gen: v6e
topology: v6e:2x2x1
jax: 0.10.0
libtpu: 0.0.40
codegen_flags: <defaults>
</compile_context>

<pallas_src>
import functools

import jax
import jax.numpy as jnp
from jax.experimental import pallas as pl
from jax.experimental.pallas import tpu as pltpu


def _round_up(n, m):
    return ((n + m - 1) // m) * m


def _mlp_kernel(x_ref, w1_ref, b1_ref, w2_ref, b2_ref, w3_ref, b3_ref,
                logits_ref, logp_ref, *, num_valid):
    bf = jnp.bfloat16
    x = x_ref[...].astype(bf)                            # (TB, D) -> bf16 for MXU
    # Layer 1 + tanh (f32 accumulate, f32 elementwise)
    h1 = jnp.dot(x, w1_ref[...], preferred_element_type=jnp.float32)
    h1 = jnp.tanh(h1 + b1_ref[...])                      # (TB, Hp) f32
    # Layer 2 + tanh
    h2 = jnp.dot(h1.astype(bf), w2_ref[...], preferred_element_type=jnp.float32)
    h2 = jnp.tanh(h2 + b2_ref[...])                      # (TB, Hp) f32
    # Layer 3 -> logits of Categorical (padded to 128 lanes; pad lanes == 0)
    logits = jnp.dot(h2.astype(bf), w3_ref[...], preferred_element_type=jnp.float32)
    logits = logits + b3_ref[...]                        # (TB, Sp) f32
    logits_ref[...] = logits

    # Normalized log-probs over the valid S lanes only (lanes >= num_valid are
    # zero padding and must be excluded from the log-sum-exp).
    lane = jax.lax.broadcasted_iota(jnp.int32, logits.shape, dimension=1)
    masked = jnp.where(lane < num_valid, logits, jnp.float32(-1e30))
    m = jnp.max(masked, axis=-1, keepdims=True)
    lse = m + jnp.log(jnp.sum(jnp.exp(masked - m), axis=-1, keepdims=True))
    logp_ref[...] = logits - lse


def morph_fc_net_forward(x, params, *, tile_b=None):
    """Returns (logits, log_probs) of the Categorical over materials.

    x: float32 [B, input_dim]
    params: dict with w1 [D,H], b1 [H], w2 [H,H], b2 [H], w3 [H,S], b3 [S]
            (weights stored transposed relative to torch.nn.Linear, so the
             kernel computes y = x @ W + b, identical math to x @ W.T + b)
    """
    w1, b1 = params["w1"], params["b1"]
    w2, b2 = params["w2"], params["b2"]
    w3, b3 = params["w3"], params["b3"]

    B, D = x.shape
    H = w1.shape[1]
    S = w3.shape[1]

    LANE = 128
    Hp = _round_up(H, LANE)   # lane-full hidden width
    Sp = _round_up(S, LANE)   # lane-dense output width

    # Batch tile: big tiles amortize the ~0.35us/step overhead; keep >=2 grid
    # steps when the batch allows so v7x's two TensorCores are both used.
    if tile_b is None:
        B8 = _round_up(B, 8)
        if B8 <= 16:
            tile_b = B8
        else:
            tile_b = min(512, _round_up(-(-B8 // 2), 8))
    B_pad = _round_up(B, tile_b)
    if B_pad != B:
        x = jnp.pad(x, ((0, B_pad - B), (0, 0)))

    bf = jnp.bfloat16
    f32 = jnp.float32
    # Zero-pad weights/biases to lane-dense widths; MXU operands in bf16.
    w1p = jnp.pad(w1, ((0, 0), (0, Hp - H))).astype(bf)
    b1p = jnp.pad(b1, (0, Hp - H)).reshape(1, Hp).astype(f32)
    w2p = jnp.pad(w2, ((0, Hp - H), (0, Hp - H))).astype(bf)
    b2p = jnp.pad(b2, (0, Hp - H)).reshape(1, Hp).astype(f32)
    w3p = jnp.pad(w3, ((0, Hp - H), (0, Sp - S))).astype(bf)
    b3p = jnp.pad(b3, (0, Sp - S)).reshape(1, Sp).astype(f32)

    grid = (B_pad // tile_b,)
    kernel = functools.partial(_mlp_kernel, num_valid=S)

    logits, logp = pl.pallas_call(
        kernel,
        out_shape=(
            jax.ShapeDtypeStruct((B_pad, Sp), jnp.float32),
            jax.ShapeDtypeStruct((B_pad, Sp), jnp.float32),
        ),
        grid_spec=pl.GridSpec(
            grid=grid,
            in_specs=[
                pl.BlockSpec((tile_b, D), lambda i: (i, 0)),   # x tile
                pl.BlockSpec((D, Hp), lambda i: (0, 0)),       # w1 (resident)
                pl.BlockSpec((1, Hp), lambda i: (0, 0)),       # b1
                pl.BlockSpec((Hp, Hp), lambda i: (0, 0)),      # w2
                pl.BlockSpec((1, Hp), lambda i: (0, 0)),       # b2
                pl.BlockSpec((Hp, Sp), lambda i: (0, 0)),      # w3
                pl.BlockSpec((1, Sp), lambda i: (0, 0)),       # b3
            ],
            out_specs=(
                pl.BlockSpec((tile_b, Sp), lambda i: (i, 0)),  # logits (lane-dense)
                pl.BlockSpec((tile_b, Sp), lambda i: (i, 0)),  # log-probs
            ),
        ),
        compiler_params=pltpu.CompilerParams(
            dimension_semantics=("parallel",)),
    )(x, w1p, b1p, w2p, b2p, w3p, b3p)

    return logits[:B, :S], logp[:B, :S]


def init_params(key, input_dim=5, hidden_dim=64, number_state=9):
    """Deterministic init matching nn.Linear's U(-1/sqrt(fan_in), +...)."""
    ks = jax.random.split(key, 6)

    def lin(kw, kb, fan_in, fan_out):
        bound = 1.0 / jnp.sqrt(jnp.float32(fan_in))
        w = jax.random.uniform(kw, (fan_in, fan_out), jnp.float32, -bound, bound)
        b = jax.random.uniform(kb, (fan_out,), jnp.float32, -bound, bound)
        return w, b

    w1, b1 = lin(ks[0], ks[1], input_dim, hidden_dim)
    w2, b2 = lin(ks[2], ks[3], hidden_dim, hidden_dim)
    w3, b3 = lin(ks[4], ks[5], hidden_dim, number_state)
    return {"w1": w1, "b1": b1, "w2": w2, "b2": b2, "w3": w3, "b3": b3}


def _reference_f32(x, p):
    h1 = jnp.tanh(x @ p["w1"] + p["b1"])
    h2 = jnp.tanh(h1 @ p["w2"] + p["b2"])
    logits = h2 @ p["w3"] + p["b3"]
    return logits, jax.nn.log_softmax(logits, axis=-1)


def _reference_bf16(x, p):
    # Matches the kernel's bf16-MXU-input / f32-accumulate path.
    bf = jnp.bfloat16
    h1 = jnp.tanh(jnp.dot(x.astype(bf), p["w1"].astype(bf),
                          preferred_element_type=jnp.float32) + p["b1"])
    h2 = jnp.tanh(jnp.dot(h1.astype(bf), p["w2"].astype(bf),
                          preferred_element_type=jnp.float32) + p["b2"])
    logits = jnp.dot(h2.astype(bf), p["w3"].astype(bf),
                     preferred_element_type=jnp.float32) + p["b3"]
    return logits, jax.nn.log_softmax(logits, axis=-1)


if __name__ == "__main__":
    key = jax.random.PRNGKey(0)
    k_param, k_x = jax.random.split(key)

    input_dim, hidden_dim, number_state = 5, 64, 9
    batch = 64  # small batch of voxel-feature vectors (>=2 grid steps)

    params = init_params(k_param, input_dim, hidden_dim, number_state)
    x = jax.random.normal(k_x, (batch, input_dim), jnp.float32)

    logits, log_probs = morph_fc_net_forward(x, params)
    jax.block_until_ready((logits, log_probs))

    # Tight check against a reference that uses the same bf16 MXU-input path.
    ref_logits, ref_logp = _reference_bf16(x, params)
    assert jnp.allclose(logits, ref_logits, atol=5e-3, rtol=5e-3)
    assert jnp.allclose(log_probs, ref_logp, atol=5e-3, rtol=5e-3)

    # Loose sanity check against the pure-f32 math of the PyTorch module.
    f32_logits, f32_logp = _reference_f32(x, params)
    assert jnp.allclose(logits, f32_logits, atol=5e-2, rtol=5e-2)
    assert jnp.allclose(log_probs, f32_logp, atol=5e-2, rtol=5e-2)

    # TODO(synk): Categorical .sample()/.mode()/.entropy() from design() are
    # host-level distribution utilities; compute them from the returned
    # log_probs (e.g. jax.random.categorical) outside the kernel.

    print("KERNEL_OK")
</pallas_src>

<mosaic_0001>
module attributes {stable_mosaic.version = 11 : i64} {
  func.func @_mlp_kernel(%arg0: i32, %arg1: memref<32x5xf32, #tpu.memory_space<vmem>>, %arg2: memref<5x128xbf16, #tpu.memory_space<vmem>>, %arg3: memref<1x128xf32, #tpu.memory_space<vmem>>, %arg4: memref<128x128xbf16, #tpu.memory_space<vmem>>, %arg5: memref<1x128xf32, #tpu.memory_space<vmem>>, %arg6: memref<128x128xbf16, #tpu.memory_space<vmem>>, %arg7: memref<1x128xf32, #tpu.memory_space<vmem>>, %arg8: memref<32x128xf32, #tpu.memory_space<vmem>>, %arg9: memref<32x128xf32, #tpu.memory_space<vmem>>) attributes {dimension_semantics = [#tpu.dimension_semantics<parallel>], iteration_bounds = array<i64: 2>, scalar_prefetch = 0 : i64, scratch_operands = 0 : i64, tpu.core_type = #tpu.core_type<tc>, window_params = [{transform_indices = @transform_0, window_bounds = array<i64: 32, 5>}, {pipeline_mode = #tpu.pipeline_mode<synchronous>, transform_indices = @transform_1, window_bounds = array<i64: 5, 128>}, {pipeline_mode = #tpu.pipeline_mode<synchronous>, transform_indices = @transform_2, window_bounds = array<i64: 1, 128>}, {pipeline_mode = #tpu.pipeline_mode<synchronous>, transform_indices = @transform_3, window_bounds = array<i64: 128, 128>}, {pipeline_mode = #tpu.pipeline_mode<synchronous>, transform_indices = @transform_4, window_bounds = array<i64: 1, 128>}, {pipeline_mode = #tpu.pipeline_mode<synchronous>, transform_indices = @transform_5, window_bounds = array<i64: 128, 128>}, {pipeline_mode = #tpu.pipeline_mode<synchronous>, transform_indices = @transform_6, window_bounds = array<i64: 1, 128>}, {transform_indices = @transform_7, window_bounds = array<i64: 32, 128>}, {transform_indices = @transform_8, window_bounds = array<i64: 32, 128>}]} {
    %c0 = arith.constant 0 : index
    %c0_0 = arith.constant 0 : index
    %0 = vector.load %arg1[%c0, %c0_0] : memref<32x5xf32, #tpu.memory_space<vmem>>, vector<32x5xf32>
    %1 = arith.truncf %0 : vector<32x5xf32> to vector<32x5xbf16>
    %c0_1 = arith.constant 0 : index
    %c0_2 = arith.constant 0 : index
    %2 = vector.load %arg2[%c0_1, %c0_2] : memref<5x128xbf16, #tpu.memory_space<vmem>>, vector<5x128xbf16>
    %cst = arith.constant dense<0.000000e+00> : vector<32x128xf32>
    %3 = tpu.matmul %1, %2, %cst {dimension_numbers = #tpu.dot_dimension_numbers<[1], [0], [0], [1], [0, 0, 1, 1], [], []>} : vector<32x5xbf16>, vector<5x128xbf16>, vector<32x128xf32> -> vector<32x128xf32>
    %c0_3 = arith.constant 0 : index
    %c0_4 = arith.constant 0 : index
    %4 = vector.load %arg3[%c0_3, %c0_4] : memref<1x128xf32, #tpu.memory_space<vmem>>, vector<1x128xf32>
    %5 = vector.broadcast %4 : vector<1x128xf32> to vector<32x128xf32>
    %6 = arith.addf %3, %5 : vector<32x128xf32>
    %7 = math.tanh %6 : vector<32x128xf32>
    %8 = arith.truncf %7 : vector<32x128xf32> to vector<32x128xbf16>
    %c0_5 = arith.constant 0 : index
    %c0_6 = arith.constant 0 : index
    %9 = vector.load %arg4[%c0_5, %c0_6] : memref<128x128xbf16, #tpu.memory_space<vmem>>, vector<128x128xbf16>
    %cst_7 = arith.constant dense<0.000000e+00> : vector<32x128xf32>
    %10 = tpu.matmul %8, %9, %cst_7 {dimension_numbers = #tpu.dot_dimension_numbers<[1], [0], [0], [1], [0, 0, 1, 1], [], []>} : vector<32x128xbf16>, vector<128x128xbf16>, vector<32x128xf32> -> vector<32x128xf32>
    %c0_8 = arith.constant 0 : index
    %c0_9 = arith.constant 0 : index
    %11 = vector.load %arg5[%c0_8, %c0_9] : memref<1x128xf32, #tpu.memory_space<vmem>>, vector<1x128xf32>
    %12 = vector.broadcast %11 : vector<1x128xf32> to vector<32x128xf32>
    %13 = arith.addf %10, %12 : vector<32x128xf32>
    %14 = math.tanh %13 : vector<32x128xf32>
    %15 = arith.truncf %14 : vector<32x128xf32> to vector<32x128xbf16>
    %c0_10 = arith.constant 0 : index
    %c0_11 = arith.constant 0 : index
    %16 = vector.load %arg6[%c0_10, %c0_11] : memref<128x128xbf16, #tpu.memory_space<vmem>>, vector<128x128xbf16>
    %cst_12 = arith.constant dense<0.000000e+00> : vector<32x128xf32>
    %17 = tpu.matmul %15, %16, %cst_12 {dimension_numbers = #tpu.dot_dimension_numbers<[1], [0], [0], [1], [0, 0, 1, 1], [], []>} : vector<32x128xbf16>, vector<128x128xbf16>, vector<32x128xf32> -> vector<32x128xf32>
    %c0_13 = arith.constant 0 : index
    %c0_14 = arith.constant 0 : index
    %18 = vector.load %arg7[%c0_13, %c0_14] : memref<1x128xf32, #tpu.memory_space<vmem>>, vector<1x128xf32>
    %19 = vector.broadcast %18 : vector<1x128xf32> to vector<32x128xf32>
    %20 = arith.addf %17, %19 : vector<32x128xf32>
    %c0_15 = arith.constant 0 : index
    %c0_16 = arith.constant 0 : index
    %21 = vector.load %arg8[%c0_15, %c0_16] : memref<32x128xf32, #tpu.memory_space<vmem>>, vector<32x128xf32>
    tpu.vector_store %arg8[%c0_15, %c0_16], %20 {strides = array<i32>} : memref<32x128xf32, #tpu.memory_space<vmem>>, vector<32x128xf32>,
    %22 = tpu.iota {dimensions = array<i32: 1>} : vector<32x128xi32>
    %c9_i32 = arith.constant 9 : i32
    %23 = vector.broadcast %c9_i32 : i32 to vector<32x128xi32>
    %24 = arith.cmpi slt, %22, %23 : vector<32x128xi32>
    %cst_17 = arith.constant -1.000000e+30 : f32
    %25 = vector.broadcast %cst_17 : f32 to vector<32x128xf32>
    %26 = arith.select %24, %20, %25 : vector<32x128xi1>, vector<32x128xf32>
    %cst_18 = arith.constant dense<0xFF800000> : vector<32xf32>
    %27 = vector.multi_reduction <maximumf>, %26, %cst_18 [1] : vector<32x128xf32> to vector<32xf32>
    %28 = vector.shape_cast %27 : vector<32xf32> to vector<32x1xf32>
    %29 = vector.broadcast %28 : vector<32x1xf32> to vector<32x128xf32>
    %30 = arith.subf %26, %29 : vector<32x128xf32>
    %31 = math.exp %30 : vector<32x128xf32>
    %cst_19 = arith.constant dense<0.000000e+00> : vector<32xf32>
    %32 = vector.multi_reduction <add>, %31, %cst_19 [1] : vector<32x128xf32> to vector<32xf32>
    %33 = vector.shape_cast %32 : vector<32xf32> to vector<32x1xf32>
    %34 = math.log %33 : vector<32x1xf32>
    %35 = arith.addf %28, %34 : vector<32x1xf32>
    %36 = vector.broadcast %35 : vector<32x1xf32> to vector<32x128xf32>
    %37 = arith.subf %20, %36 : vector<32x128xf32>
    %c0_20 = arith.constant 0 : index
    %c0_21 = arith.constant 0 : index
    %38 = vector.load %arg9[%c0_20, %c0_21] : memref<32x128xf32, #tpu.memory_space<vmem>>, vector<32x128xf32>
    tpu.vector_store %arg9[%c0_20, %c0_21], %37 {strides = array<i32>} : memref<32x128xf32, #tpu.memory_space<vmem>>, vector<32x128xf32>,
    return
  }
  func.func @transform_0(%arg0: i32) -> (i32, i32) {
    %c0_i32 = arith.constant 0 : i32
    %c0_i32_0 = arith.constant 0 : i32
    return %arg0, %c0_i32 : i32, i32
  }
  func.func @transform_1(%arg0: i32) -> (i32, i32) {
    %c0_i32 = arith.constant 0 : i32
    %c0_i32_0 = arith.constant 0 : i32
    %c0_i32_1 = arith.constant 0 : i32
    return %c0_i32, %c0_i32_0 : i32, i32
  }
  func.func @transform_2(%arg0: i32) -> (i32, i32) {
    %c0_i32 = arith.constant 0 : i32
    %c0_i32_0 = arith.constant 0 : i32
    %c0_i32_1 = arith.constant 0 : i32
    return %c0_i32, %c0_i32_0 : i32, i32
  }
  func.func @transform_3(%arg0: i32) -> (i32, i32) {
    %c0_i32 = arith.constant 0 : i32
    %c0_i32_0 = arith.constant 0 : i32
    %c0_i32_1 = arith.constant 0 : i32
    return %c0_i32, %c0_i32_0 : i32, i32
  }
  func.func @transform_4(%arg0: i32) -> (i32, i32) {
    %c0_i32 = arith.constant 0 : i32
    %c0_i32_0 = arith.constant 0 : i32
    %c0_i32_1 = arith.constant 0 : i32
    return %c0_i32, %c0_i32_0 : i32, i32
  }
  func.func @transform_5(%arg0: i32) -> (i32, i32) {
    %c0_i32 = arith.constant 0 : i32
    %c0_i32_0 = arith.constant 0 : i32
    %c0_i32_1 = arith.constant 0 : i32
    return %c0_i32, %c0_i32_0 : i32, i32
  }
  func.func @transform_6(%arg0: i32) -> (i32, i32) {
    %c0_i32 = arith.constant 0 : i32
    %c0_i32_0 = arith.constant 0 : i32
    %c0_i32_1 = arith.constant 0 : i32
    return %c0_i32, %c0_i32_0 : i32, i32
  }
  func.func @transform_7(%arg0: i32) -> (i32, i32) {
    %c0_i32 = arith.constant 0 : i32
    %c0_i32_0 = arith.constant 0 : i32
    return %arg0, %c0_i32 : i32, i32
  }
  func.func @transform_8(%arg0: i32) -> (i32, i32) {
    %c0_i32 = arith.constant 0 : i32
    %c0_i32_0 = arith.constant 0 : i32
    return %arg0, %c0_i32 : i32, i32
  }
}

</mosaic_0001>

<llo_original>
// kernel: tpu_custom_call.1
$region0: #{tpu_custom_call.1}
  #allocation0 [shape = 'u32[]', space=smem, size = 0x4, offset = 0x4, fixed_abs, tag = 'smem constant byte address 0x4 - core index']
  #allocation1 [shape = 'u32[144,128]{1,0:T(1,128)}', space=vmem, size = 0x12000, scoped, tag = 'internal scratch']
  %s0 = inlined_call_operand.vmem [shape: f32[64,5], index: 0, kind: input, shape index: {}]
  %s1 = inlined_call_operand.vmem [shape: bf16[5,128], index: 1, kind: input, shape index: {}]
  %s2 = inlined_call_operand.vmem [shape: f32[1,128], index: 2, kind: input, shape index: {}]
  %s3 = inlined_call_operand.vmem [shape: bf16[128,128], index: 3, kind: input, shape index: {}]
  %s4 = inlined_call_operand.vmem [shape: f32[1,128], index: 4, kind: input, shape index: {}]
  %s5 = inlined_call_operand.hbm [shape: bf16[128,128], index: 5, kind: input, shape index: {}]
  %s6 = inlined_call_operand.vmem [shape: f32[1,128], index: 6, kind: input, shape index: {}]
  %s7 = inlined_call_operand.hbm [shape: f32[64,128], index: 7, kind: output, shape index: {0}]
  %s8 = inlined_call_operand.hbm [shape: f32[64,128], index: 8, kind: output, shape index: {1}]
  %9 = xla_tuple %s7, %s8
  %s10 = sld [smem:[#allocation0]]
  $region73: #{tpu_custom_call.1} parent=0
    _
  %s12 = ssub.s32 1, %s10
  %s13 = scalar_select 0, %s12, %s10
  $region1: #{tpu_custom_call.1} parent=0
    #allocation2 [shape = 'u8[32768]{0}', space=vmem, size = 0x8000, scoped, tag = 'input window, operand 5, single buffered']
    #allocation3 [shape = 's32[2]{0}', space=sflag, size = 0x8, scoped, tag = 'scoped memory for tpu_custom_call.1']
    #allocation4 [shape = 's32[2]{0}', space=sflag, size = 0x8, scoped, tag = 'scoped memory for tpu_custom_call.1']
    #allocation5 [shape = 'u8[32768]{0}', space=vmem, size = 0x8000, scoped, tag = 'output window, operand 0']
    #allocation6 [shape = 'u8[32768]{0}', space=vmem, size = 0x8000, scoped, tag = 'output window, operand 1']
    #allocation7 [shape = 's32[2]{0}', space=sflag, size = 0x8, scoped, tag = 'scoped memory for tpu_custom_call.1']
    %14 = vsyncpa [#allocation3], 0
    %15 = vsyncpa [#allocation4], 0
    %s16 = scalar_lea.sflag [#allocation4], 1
    %17 = vsyncpa %s16, 0
    %18 = vsyncpa [#allocation7], 0
    %s19 = scalar_lea.sflag [#allocation7], 1
    %20 = vsyncpa %s19, 0
    loop: start=0, step=1, limit=4
    $region2: #{tpu_custom_call.1} parent=1 // loop_pre_header
      _
    $region3: #{tpu_custom_call.1} parent=1 // loop_header
      %s22 = sphi 0, %s26
      %p23 = scmp.ge.s32.totalorder %s22, 4
      %s32 = sphi 0, %s34
      %s35 = sphi 0, %s32
      %s36 = sphi 0, %s35
      %s52 = sphi 0, %s36
      %s56 = sphi 0, %s56
      %s58 = sphi 0, %s56
      %s59 = sphi 0, %s58
      %s73 = sphi 0, %s59
      %s77 = sphi 0, %s77
      %s79 = sphi 0, %s77
      %s80 = sphi 0, %s79
      %s94 = sphi 0, %s80
      %s98 = sphi 0, %s98
      %s100 = sphi 0, %s98
      %s101 = sphi 0, %s100
      %s115 = sphi 0, %s101
      %s119 = sphi 0, %s119
      %s121 = sphi 0, %s119
      %s122 = sphi 0, %s121
      %s136 = sphi 0, %s122
      %s140 = sphi 0, %s140
      %s142 = sphi 0, %s140
      %s143 = sphi 0, %s142
      %s157 = sphi 0, %s143
      %s161 = sphi 0, %s161
      %s163 = sphi 0, %s161
      %s164 = sphi 0, %s163
      %s178 = sphi 0, %s164
      %s184 = sphi 0, %s186
      %s187 = sphi 0, %s184
      %s188 = sphi 0, %s187
      %s204 = sphi 0, %s188
      %s210 = sphi 0, %s212
      %s213 = sphi 0, %s210
      %s214 = sphi 0, %s213
      %s230 = sphi 0, %s214
    $region4: #{tpu_custom_call.1} parent=1 // loop_header_branch
      %25 = sbr.rel (%p23) target = $region8
    $region5: #{tpu_custom_call.1} parent=1 // loop_body
      %s27 = ssub.s32 %s22, 1
      %s28 = ssub.s32 %s22, 2
      %s29 = sadd.s32 %s22, 1
      %s30 = ssub.s32 %s22, %s29
      %p31 = scmp.eq.s32.totalorder %s30, 0
      %s33 = sadd.s32 %s32, 1
      %s34 = scalar_select %p31, %s32, %s33
      %p37 = pneg %p31
      %p38 = scmp.eq.s32.totalorder %s22, 1
      %p39 = por %p37, %p38
      %p40 = scmp.ne.s32.totalorder %s32, %s35
      %p41 = scmp.eq.s32.totalorder %s22, 0
      %p42 = por %p40, %p41
      %p43 = scmp.ne.s32.totalorder %s32, %s35
      %p44 = scmp.eq.s32.totalorder %s27, 1
      %p45 = por %p43, %p44
      %p46 = scmp.ne.s32.totalorder %s35, %s36
      %p47 = scmp.eq.s32.totalorder %s27, 0
      %p48 = por %p46, %p47
      %p49 = scmp.ne.s32.totalorder %s35, %s36
      %p50 = scmp.eq.s32.totalorder %s28, 1
      %p51 = por %p49, %p50
      %p53 = scmp.ne.s32.totalorder %s36, %s52
      %p54 = scmp.eq.s32.totalorder %s28, 0
      %p55 = por %p53, %p54
      %s57 = sadd.s32 %s56, 1
      %p60 = scmp.eq.s32.totalorder %s22, 1
      %p61 = scmp.ne.s32.totalorder %s56, %s58
      %p62 = scmp.eq.s32.totalorder %s22, 0
      %p63 = por %p61, %p62
      %p64 = scmp.ne.s32.totalorder %s56, %s58
      %p65 = scmp.eq.s32.totalorder %s27, 1
      %p66 = por %p64, %p65
      %p67 = scmp.ne.s32.totalorder %s58, %s59
      %p68 = scmp.eq.s32.totalorder %s27, 0
      %p69 = por %p67, %p68
      %p70 = scmp.ne.s32.totalorder %s58, %s59
      %p71 = scmp.eq.s32.totalorder %s28, 1
      %p72 = por %p70, %p71
      %p74 = scmp.ne.s32.totalorder %s59, %s73
      %p75 = scmp.eq.s32.totalorder %s28, 0
      %p76 = por %p74, %p75
      %s78 = sadd.s32 %s77, 1
      %p81 = scmp.eq.s32.totalorder %s22, 1
      %p82 = scmp.ne.s32.totalorder %s77, %s79
      %p83 = scmp.eq.s32.totalorder %s22, 0
      %p84 = por %p82, %p83
      %p85 = scmp.ne.s32.totalorder %s77, %s79
      %p86 = scmp.eq.s32.totalorder %s27, 1
      %p87 = por %p85, %p86
      %p88 = scmp.ne.s32.totalorder %s79, %s80
      %p89 = scmp.eq.s32.totalorder %s27, 0
      %p90 = por %p88, %p89
      %p91 = scmp.ne.s32.totalorder %s79, %s80
      %p92 = scmp.eq.s32.totalorder %s28, 1
      %p93 = por %p91, %p92
      %p95 = scmp.ne.s32.totalorder %s80, %s94
      %p96 = scmp.eq.s32.totalorder %s28, 0
      %p97 = por %p95, %p96
      %s99 = sadd.s32 %s98, 1
      %p102 = scmp.eq.s32.totalorder %s22, 1
      %p103 = scmp.ne.s32.totalorder %s98, %s100
      %p104 = scmp.eq.s32.totalorder %s22, 0
      %p105 = por %p103, %p104
      %p106 = scmp.ne.s32.totalorder %s98, %s100
      %p107 = scmp.eq.s32.totalorder %s27, 1
      %p108 = por %p106, %p107
      %p109 = scmp.ne.s32.totalorder %s100, %s101
      %p110 = scmp.eq.s32.totalorder %s27, 0
      %p111 = por %p109, %p110
      %p112 = scmp.ne.s32.totalorder %s100, %s101
      %p113 = scmp.eq.s32.totalorder %s28, 1
      %p114 = por %p112, %p113
      %p116 = scmp.ne.s32.totalorder %s101, %s115
      %p117 = scmp.eq.s32.totalorder %s28, 0
      %p118 = por %p116, %p117
      %s120 = sadd.s32 %s119, 1
      %p123 = scmp.eq.s32.totalorder %s22, 1
      %p124 = scmp.ne.s32.totalorder %s119, %s121
      %p125 = scmp.eq.s32.totalorder %s22, 0
      %p126 = por %p124, %p125
      %p127 = scmp.ne.s32.totalorder %s119, %s121
      %p128 = scmp.eq.s32.totalorder %s27, 1
      %p129 = por %p127, %p128
      %p130 = scmp.ne.s32.totalorder %s121, %s122
      %p131 = scmp.eq.s32.totalorder %s27, 0
      %p132 = por %p130, %p131
      %p133 = scmp.ne.s32.totalorder %s121, %s122
      %p134 = scmp.eq.s32.totalorder %s28, 1
      %p135 = por %p133, %p134
      %p137 = scmp.ne.s32.totalorder %s122, %s136
      %p138 = scmp.eq.s32.totalorder %s28, 0
      %p139 = por %p137, %p138
      %s141 = sadd.s32 %s140, 1
      %p144 = scmp.eq.s32.totalorder %s22, 1
      %p145 = scmp.ne.s32.totalorder %s140, %s142
      %p146 = scmp.eq.s32.totalorder %s22, 0
      %p147 = por %p145, %p146
      %p148 = scmp.ne.s32.totalorder %s140, %s142
      %p149 = scmp.eq.s32.totalorder %s27, 1
      %p150 = por %p148, %p149
      %p151 = scmp.ne.s32.totalorder %s142, %s143
      %p152 = scmp.eq.s32.totalorder %s27, 0
      %p153 = por %p151, %p152
      %p154 = scmp.ne.s32.totalorder %s142, %s143
      %p155 = scmp.eq.s32.totalorder %s28, 1
      %p156 = por %p154, %p155
      %p158 = scmp.ne.s32.totalorder %s143, %s157
      %p159 = scmp.eq.s32.totalorder %s28, 0
      %p160 = por %p158, %p159
      %s162 = sadd.s32 %s161, 1
      %p165 = scmp.eq.s32.totalorder %s22, 1
      %p166 = scmp.ne.s32.totalorder %s161, %s163
      %p167 = scmp.eq.s32.totalorder %s22, 0
      %p168 = por %p166, %p167
      %p169 = scmp.ne.s32.totalorder %s161, %s163
      %p170 = scmp.eq.s32.totalorder %s27, 1
      %p171 = por %p169, %p170
      %p172 = scmp.ne.s32.totalorder %s163, %s164
      %p173 = scmp.eq.s32.totalorder %s27, 0
      %p174 = por %p172, %p173
      %p175 = scmp.ne.s32.totalorder %s163, %s164
      %p176 = scmp.eq.s32.totalorder %s28, 1
      %p177 = por %p175, %p176
      %p179 = scmp.ne.s32.totalorder %s164, %s178
      %p180 = scmp.eq.s32.totalorder %s28, 0
      %p181 = por %p179, %p180
      %s182 = ssub.s32 %s22, %s29
      %p183 = scmp.eq.s32.totalorder %s182, 0
      %s185 = sadd.s32 %s184, 1
      %s186 = scalar_select %p183, %s184, %s185
      %p189 = pneg %p183
      %p190 = scmp.eq.s32.totalorder %s22, 1
      %p191 = por %p189, %p190
      %p192 = scmp.ne.s32.totalorder %s184, %s187
      %p193 = scmp.eq.s32.totalorder %s22, 0
      %p194 = por %p192, %p193
      %p195 = scmp.ne.s32.totalorder %s184, %s187
      %p196 = scmp.eq.s32.totalorder %s27, 1
      %p197 = por %p195, %p196
      %p198 = scmp.ne.s32.totalorder %s187, %s188
      %p199 = scmp.eq.s32.totalorder %s27, 0
      %p200 = por %p198, %p199
      %p201 = scmp.ne.s32.totalorder %s187, %s188
      %p202 = scmp.eq.s32.totalorder %s28, 1
      %p203 = por %p201, %p202
      %p205 = scmp.ne.s32.totalorder %s188, %s204
      %p206 = scmp.eq.s32.totalorder %s28, 0
      %p207 = por %p205, %p206
      %s208 = ssub.s32 %s22, %s29
      %p209 = scmp.eq.s32.totalorder %s208, 0
      %s211 = sadd.s32 %s210, 1
      %s212 = scalar_select %p209, %s210, %s211
      %p215 = pneg %p209
      %p216 = scmp.eq.s32.totalorder %s22, 1
      %p217 = por %p215, %p216
      %p218 = scmp.ne.s32.totalorder %s210, %s213
      %p219 = scmp.eq.s32.totalorder %s22, 0
      %p220 = por %p218, %p219
      %p221 = scmp.ne.s32.totalorder %s210, %s213
      %p222 = scmp.eq.s32.totalorder %s27, 1
      %p223 = por %p221, %p222
      %p224 = scmp.ne.s32.totalorder %s213, %s214
      %p225 = scmp.eq.s32.totalorder %s27, 0
      %p226 = por %p224, %p225
      %p227 = scmp.ne.s32.totalorder %s213, %s214
      %p228 = scmp.eq.s32.totalorder %s28, 1
      %p229 = por %p227, %p228
      %p231 = scmp.ne.s32.totalorder %s214, %s230
      %p232 = scmp.eq.s32.totalorder %s28, 0
      %p233 = por %p231, %p232
      %p234 = scmp.le.s32.totalorder 1, %s22
      %p235 = scmp.lt.s32.totalorder %s22, 3
      %p236 = pnand %p234, %p235
      %p237 = pneg %p236
      // Predicated region
      $region9: #{tpu_custom_call.1} parent=5 // pred_check
        _
      $region10: #{tpu_custom_call.1} parent=5 // pred_check_branch
        %239 = sbr.rel (%p236) target = $region12
      $region11: #{tpu_custom_call.1} parent=5 // pred_region
        %s240 = ssub.s32 %s22, 1
        // Predicated region
        $region13: #{tpu_custom_call.1} parent=11 // pred_check
          %p241 = pneg %p69
        $region14: #{tpu_custom_call.1} parent=11 // pred_check_branch
          %243 = sbr.rel (%p241) target = $region16
        $region15: #{tpu_custom_call.1} parent=11 // pred_region
          _
        $region16: #{tpu_custom_call.1} parent=11 // pred_fallthru
          _
        // Predicated region
        $region17: #{tpu_custom_call.1} parent=11 // pred_check
          %p244 = pneg %p90
        $region18: #{tpu_custom_call.1} parent=11 // pred_check_branch
          %246 = sbr.rel (%p244) target = $region20
        $region19: #{tpu_custom_call.1} parent=11 // pred_region
          _
        $region20: #{tpu_custom_call.1} parent=11 // pred_fallthru
          _
        // Predicated region
        $region21: #{tpu_custom_call.1} parent=11 // pred_check
          %p247 = pneg %p111
        $region22: #{tpu_custom_call.1} parent=11 // pred_check_branch
          %249 = sbr.rel (%p247) target = $region24
        $region23: #{tpu_custom_call.1} parent=11 // pred_region
          _
        $region24: #{tpu_custom_call.1} parent=11 // pred_fallthru
          _
        // Predicated region
        $region25: #{tpu_custom_call.1} parent=11 // pred_check
          %p250 = pneg %p132
        $region26: #{tpu_custom_call.1} parent=11 // pred_check_branch
          %252 = sbr.rel (%p250) target = $region28
        $region27: #{tpu_custom_call.1} parent=11 // pred_region
          _
        $region28: #{tpu_custom_call.1} parent=11 // pred_fallthru
          _
        // Predicated region
        $region29: #{tpu_custom_call.1} parent=11 // pred_check
          %p253 = pneg %p153
        $region30: #{tpu_custom_call.1} parent=11 // pred_check_branch
          %255 = sbr.rel (%p253) target = $region32
        $region31: #{tpu_custom_call.1} parent=11 // pred_region
          %s257 = ssub.s32 1024, 1024
          %258 = vsyncadd [#allocation3], %s257
          %s259 = sshll.u32 [#allocation2], 4
          %s260 = int_to_ptr.vmem [resolvable:$true] %s259
          %265 = dma.hbm_to_vmem [thread:$0]  %s5, 1024, %s260, [#allocation3], 64, 64, 4
        $region32: #{tpu_custom_call.1} parent=11 // pred_fallthru
          _
        // Predicated region
        $region33: #{tpu_custom_call.1} parent=11 // pred_check
          %p266 = pneg %p174
        $region34: #{tpu_custom_call.1} parent=11 // pred_check_branch
          %268 = sbr.rel (%p266) target = $region36
        $region35: #{tpu_custom_call.1} parent=11 // pred_region
          _
        $region36: #{tpu_custom_call.1} parent=11 // pred_fallthru
          _
      $region12: #{tpu_custom_call.1} parent=5 // pred_fallthru
        _
      %p269 = scmp.lt.s32.totalorder %s22, 2
      // Predicated region
      $region37: #{tpu_custom_call.1} parent=5 // pred_check
        %p270 = pneg %p269
      $region38: #{tpu_custom_call.1} parent=5 // pred_check_branch
        %272 = sbr.rel (%p270) target = $region40
      $region39: #{tpu_custom_call.1} parent=5 // pred_region
        // Predicated region
        $region41: #{tpu_custom_call.1} parent=39 // pred_check
          %p273 = pneg %p42
        $region42: #{tpu_custom_call.1} parent=39 // pred_check_branch
          %275 = sbr.rel (%p273) target = $region44
        $region43: #{tpu_custom_call.1} parent=39 // pred_region
          %s276 = smul.u32 4, %s22
          %p277 = scmp.lt.s32.totalorder %s276, 7
          %s278 = scalar_select %p277, %s276, 7
          %s279 = smul.addr %s278, 8
          %s280 = scalar_lea.vmem %s0, %s279
          %s281 = smul.u32 4, %s22
        $region44: #{tpu_custom_call.1} parent=39 // pred_fallthru
          _
      $region40: #{tpu_custom_call.1} parent=5 // pred_fallthru
        _
      %p282 = scmp.le.s32.totalorder 1, %s22
      %p283 = scmp.lt.s32.totalorder %s22, 3
      %p284 = pnand %p282, %p283
      %p285 = pneg %p284
      // Predicated region
      $region45: #{tpu_custom_call.1} parent=5 // pred_check
        _
      $region46: #{tpu_custom_call.1} parent=5 // pred_check_branch
        %287 = sbr.rel (%p284) target = $region48
      $region47: #{tpu_custom_call.1} parent=5 // pred_region
        %s288 = ssub.s32 %s22, 1
        // Predicated region
        $region49: #{tpu_custom_call.1} parent=47 // pred_check
          %p289 = pneg %p153
        $region50: #{tpu_custom_call.1} parent=47 // pred_check_branch
          %291 = sbr.rel (%p289) target = $region52
        $region51: #{tpu_custom_call.1} parent=47 // pred_region
          %292 = dma.done [#allocation3], 1024
        $region52: #{tpu_custom_call.1} parent=47 // pred_fallthru
          _
        %s293 = smul.u32 4, %s27
        %p294 = scmp.lt.s32.totalorder %s293, 7
        %s295 = scalar_select %p294, %s293, 7
        %s296 = smul.addr %s295, 8
        %s297 = scalar_lea.vmem %s0, %s296
        %p298 = pneg %p48
        %p299 = pneg %p45
        %p300 = pneg %p69
        %p301 = pneg %p66
        %p302 = pneg %p90
        %p303 = pneg %p87
        %p304 = pneg %p111
        %p305 = pneg %p108
        %p306 = pneg %p132
        %p307 = pneg %p129
        %p308 = pneg %p153
        %p309 = pneg %p150
        %p310 = pneg %p174
        %p311 = pneg %p171
        %p312 = pneg %p200
        %p313 = pneg %p197
        %s314 = sand.u32 %s187, 1
        %s315 = scalar_lea.sflag [#allocation4], %s314
        %s316 = sand.u32 %s187, 1
        %s317 = smul.addr %s316, 32
        %s318 = scalar_lea.vmem [#allocation5], %s317
        %p319 = pneg %p226
        %p320 = pneg %p223
        %s321 = sand.u32 %s213, 1
        %s322 = scalar_lea.sflag [#allocation7], %s321
        %s323 = sand.u32 %s213, 1
        %s324 = smul.addr %s323, 32
        %s325 = scalar_lea.vmem [#allocation6], %s324
        %s326 = smul.u32 4, %s27
        %p327 = scmp.lt.s32.totalorder %s326, 7
        %s328 = scalar_select %p327, %s326, 7
        %s329 = smul.addr %s328, 8
        %s330 = scalar_lea.vmem %s0, %s329
        %s331 = smul.u32 4, %s27
        %s332 = smul.u32 4, %s27
        %s333 = smul.u32 4, %s27
        %v335 = vld [vmem:[%s330] sm:$0xff]
        %v336 = vld [vmem:[%s330 + $0x8] sm:$0xff]
        %v337 = vld [vmem:[%s330 + $0x10] sm:$0xff]
        %v338 = vld [vmem:[%s330 + $0x18] sm:$0xff]
        %v339 = vpack.c.bf16 %v336, %v335
        %v340 = vpack.c.bf16 %v338, %v337
        %v341 = vld [vmem:[%s1] sm:$0x7]
        %v342 = vld [vmem:[%s2] sm:$0x1]
        %v344 = vlaneseq
        %v345 = vshrl.u32 %v344, 7
        %v346 = vsub.s32 0, %v345
        %v347 = vrot.slane %v342, %v346
        %vm349 = vcmask 39936
        %v351 = vsel %vm349, %v339, 0
        %v354 = vsel %vm349, %v340, 0
        %vm356 = vcmask 1041408
        %vm357 = vcmask 1042432
        %v358 = vsel %vm356, 4294967295, 65535
        %v359 = vsel %vm357, %v358, 0
        %v361 = vand.u32 %v341, %v359
        %363 = vmatprep.subr.bf16.mxu0 0
        %364 = vmatpush1.bf16.msra.mxu0 0
        %365 = vmatprep.subr.bf16.mxu0 0
        %366 = vmatpush1.bf16.msra.mxu0 0
        %367 = vmatprep.subr.bf16.mxu0 0
        %368 = vmatpush1.bf16.msra.mxu0 0
        %369 = vmatprep.subr.bf16.mxu0 0
        %370 = vmatpush1.bf16.msra.mxu0 0
        %371 = vmatprep.subr.bf16.mxu0 0
        %372 = vmatpush1.bf16.msra.mxu0 0
        %373 = vmatprep.subr.bf16.mxu0 0
        %374 = vmatpush1.bf16.msra.mxu0 0
        %375 = vmatprep.subr.bf16.mxu0 0
        %376 = vmatpush1.bf16.msra.mxu0 0
        %377 = vmatprep.subr.bf16.mxu0 0
        %378 = vmatpush1.bf16.msra.mxu0 %v361
        %379 = vmatprep.subr.bf16.mxu0 0
        %380 = vmatpush2.bf16.msra.mxu0 0
        %381 = vmatprep.subr.bf16.mxu0 0
        %382 = vmatpush2.bf16.msra.mxu0 0
        %383 = vmatprep.subr.bf16.mxu0 0
        %384 = vmatpush2.bf16.msra.mxu0 0
        %385 = vmatprep.subr.bf16.mxu0 0
        %386 = vmatpush2.bf16.msra.mxu0 0
        %387 = vmatprep.subr.bf16.mxu0 0
        %388 = vmatpush2.bf16.msra.mxu0 0
        %389 = vmatprep.subr.bf16.mxu0 0
        %390 = vmatpush2.bf16.msra.mxu0 0
        %391 = vmatprep.subr.bf16.mxu0 0
        %392 = vmatpush2.bf16.msra.mxu0 0
        %393 = vmatprep.subr.bf16.mxu0 0
        %394 = vmatpush2.bf16.msra.mxu0 0
        %395 = vmatprep.mubr.bf16.mxu0 0
        %396 = vmatmul.mubr.bf16.gmra.mxu0 %v351
        %v397 = vpop.f32.mrf.mxu0
        %v398 = vadd.f32 %v347, %v397
        %v399 = vpop.f32.mrf.mxu0
        %v400 = vpop.f32.mrf.mxu0
        %v401 = vadd.f32 %v347, %v400
        %v402 = vpop.f32.mrf.mxu0
        %403 = vmatprep.mubr.bf16.mxu0 0
        %404 = vmatmul.mubr.bf16.gmra.mxu0 %v354
        %v405 = vpop.f32.mrf.mxu0
        %v406 = vadd.f32 %v347, %v405
        %v407 = vpop.f32.mrf.mxu0
        %v408 = vpop.f32.mrf.mxu0
        %v409 = vadd.f32 %v347, %v408
        %v410 = vpop.f32.mrf.mxu0
        %411 = vdwg.mxu0
        %v412 = vtanh.pop %v398
        %v413 = vtanh.pop %v401
        %v414 = vtanh.pop %v406
        %v415 = vtanh.pop %v409
        %v416 = vpack.c.bf16 %v413, %v412
        %v417 = vpack.c.bf16 %v415, %v414
        %v418 = vld [vmem:[%s3] sm:$0xf]
        %v419 = vld [vmem:[%s3 + $0x4] sm:$0xf]
        %v420 = vld [vmem:[%s3 + $0x8] sm:$0xf]
        %v421 = vld [vmem:[%s3 + $0xc] sm:$0xf]
        %v422 = vld [vmem:[%s3 + $0x10] sm:$0xf]
        %v423 = vld [vmem:[%s3 + $0x14] sm:$0xf]
        %v424 = vld [vmem:[%s3 + $0x18] sm:$0xf]
        %v425 = vld [vmem:[%s3 + $0x1c] sm:$0xf]
        %v426 = vld [vmem:[%s3 + $0x20] sm:$0xf]
        %v427 = vld [vmem:[%s3 + $0x24] sm:$0xf]
        %v428 = vld [vmem:[%s3 + $0x28] sm:$0xf]
        %v429 = vld [vmem:[%s3 + $0x2c] sm:$0xf]
        %v430 = vld [vmem:[%s3 + $0x30] sm:$0xf]
        %v431 = vld [vmem:[%s3 + $0x34] sm:$0xf]
        %v432 = vld [vmem:[%s3 + $0x38] sm:$0xf]
        %v433 = vld [vmem:[%s3 + $0x3c] sm:$0xf]
        %v434 = vld [vmem:[%s4] sm:$0x1]
        %v436 = vlaneseq
        %v437 = vshrl.u32 %v436, 7
        %v438 = vsub.s32 0, %v437
        %v439 = vrot.slane %v434, %v438
        %v457 = vunpack.c.l.b16 %v418
        %v458 = vunpack.c.l.b16 %v419
        %v459 = vunpack.c.l.b16 %v420
        %v460 = vunpack.c.l.b16 %v421
        %v461 = vunpack.c.l.b16 %v422
        %v462 = vunpack.c.l.b16 %v423
        %v463 = vunpack.c.l.b16 %v424
        %v464 = vunpack.c.l.b16 %v425
        %v465 = vunpack.c.l.b16 %v426
        %v466 = vunpack.c.l.b16 %v427
        %v467 = vunpack.c.l.b16 %v428
        %v468 = vunpack.c.l.b16 %v429
        %v469 = vunpack.c.l.b16 %v430
        %v470 = vunpack.c.l.b16 %v431
        %v471 = vunpack.c.l.b16 %v432
        %v472 = vunpack.c.l.b16 %v433
        %v473 = vpack.c.b16 %v458, %v457
        %v474 = vpack.c.b16 %v460, %v459
        %v475 = vpack.c.b16 %v462, %v461
        %v476 = vpack.c.b16 %v464, %v463
        %v477 = vpack.c.b16 %v466, %v465
        %v478 = vpack.c.b16 %v468, %v467
        %v479 = vpack.c.b16 %v470, %v469
        %v480 = vpack.c.b16 %v472, %v471
        %489 = vmatprep.subr.bf16.mxu0 0
        %490 = vmatpush1.bf16.msra.mxu0 %v480
        %491 = vmatprep.subr.bf16.mxu0 0
        %492 = vmatpush1.bf16.msra.mxu0 %v479
        %493 = vmatprep.subr.bf16.mxu0 0
        %494 = vmatpush1.bf16.msra.mxu0 %v478
        %495 = vmatprep.subr.bf16.mxu0 0
        %496 = vmatpush1.bf16.msra.mxu0 %v477
        %497 = vmatprep.subr.bf16.mxu0 0
        %498 = vmatpush1.bf16.msra.mxu0 %v476
        %499 = vmatprep.subr.bf16.mxu0 0
        %500 = vmatpush1.bf16.msra.mxu0 %v475
        %501 = vmatprep.subr.bf16.mxu0 0
        %502 = vmatpush1.bf16.msra.mxu0 %v474
        %503 = vmatprep.subr.bf16.mxu0 0
        %504 = vmatpush1.bf16.msra.mxu0 %v473
        %505 = vmatprep.subr.bf16.mxu0 0
        %506 = vmatpush2.bf16.msra.mxu0 0
        %507 = vmatprep.subr.bf16.mxu0 0
        %508 = vmatpush2.bf16.msra.mxu0 0
        %509 = vmatprep.subr.bf16.mxu0 0
        %510 = vmatpush2.bf16.msra.mxu0 0
        %511 = vmatprep.subr.bf16.mxu0 0
        %512 = vmatpush2.bf16.msra.mxu0 0
        %513 = vmatprep.subr.bf16.mxu0 0
        %514 = vmatpush2.bf16.msra.mxu0 0
        %515 = vmatprep.subr.bf16.mxu0 0
        %516 = vmatpush2.bf16.msra.mxu0 0
        %517 = vmatprep.subr.bf16.mxu0 0
        %518 = vmatpush2.bf16.msra.mxu0 0
        %519 = vmatprep.subr.bf16.mxu0 0
        %520 = vmatpush2.bf16.msra.mxu0 0
        %521 = vmatprep.mubr.bf16.mxu0 0
        %522 = vmatmul.mubr.bf16.gmra.mxu0 %v416
        %v523 = vpop.f32.mrf.mxu0
        %v524 = vadd.f32 %v439, %v523
        %v525 = vpop.f32.mrf.mxu0
        %v526 = vpop.f32.mrf.mxu0
        %v527 = vadd.f32 %v439, %v526
        %v528 = vpop.f32.mrf.mxu0
        %529 = vmatprep.mubr.bf16.mxu0 0
        %530 = vmatmul.mubr.bf16.gmra.mxu0 %v417
        %v531 = vpop.f32.mrf.mxu0
        %v532 = vadd.f32 %v439, %v531
        %v533 = vpop.f32.mrf.mxu0
        %v534 = vpop.f32.mrf.mxu0
        %v535 = vadd.f32 %v439, %v534
        %v536 = vpop.f32.mrf.mxu0
        %537 = vdwg.mxu0
        %v538 = vtanh.pop %v524
        %v539 = vtanh.pop %v527
        %v540 = vtanh.pop %v532
        %v541 = vtanh.pop %v535
        %v542 = vpack.c.bf16 %v539, %v538
        %v543 = vpack.c.bf16 %v541, %v540
        %v544 = vld [vmem:[#allocation2] sm:$0xf]
        %v545 = vld [vmem:[#allocation2 + $0x4] sm:$0xf]
        %v546 = vld [vmem:[#allocation2 + $0x8] sm:$0xf]
        %v547 = vld [vmem:[#allocation2 + $0xc] sm:$0xf]
        %v548 = vld [vmem:[#allocation2 + $0x10] sm:$0xf]
        %v549 = vld [vmem:[#allocation2 + $0x14] sm:$0xf]
        %v550 = vld [vmem:[#allocation2 + $0x18] sm:$0xf]
        %v551 = vld [vmem:[#allocation2 + $0x1c] sm:$0xf]
        %v552 = vld [vmem:[#allocation2 + $0x20] sm:$0xf]
        %v553 = vld [vmem:[#allocation2 + $0x24] sm:$0xf]
        %v554 = vld [vmem:[#allocation2 + $0x28] sm:$0xf]
        %v555 = vld [vmem:[#allocation2 + $0x2c] sm:$0xf]
        %v556 = vld [vmem:[#allocation2 + $0x30] sm:$0xf]
        %v557 = vld [vmem:[#allocation2 + $0x34] sm:$0xf]
        %v558 = vld [vmem:[#allocation2 + $0x38] sm:$0xf]
        %v559 = vld [vmem:[#allocation2 + $0x3c] sm:$0xf]
        %v560 = vld [vmem:[%s6] sm:$0x1]
        %v562 = vlaneseq
        %v563 = vshrl.u32 %v562, 7
        %v564 = vsub.s32 0, %v563
        %v565 = vrot.slane %v560, %v564
        %v583 = vunpack.c.l.b16 %v544
        %v584 = vunpack.c.l.b16 %v545
        %v585 = vunpack.c.l.b16 %v546
        %v586 = vunpack.c.l.b16 %v547
        %v587 = vunpack.c.l.b16 %v548
        %v588 = vunpack.c.l.b16 %v549
        %v589 = vunpack.c.l.b16 %v550
        %v590 = vunpack.c.l.b16 %v551
        %v591 = vunpack.c.l.b16 %v552
        %v592 = vunpack.c.l.b16 %v553
        %v593 = vunpack.c.l.b16 %v554
        %v594 = vunpack.c.l.b16 %v555
        %v595 = vunpack.c.l.b16 %v556
        %v596 = vunpack.c.l.b16 %v557
        %v597 = vunpack.c.l.b16 %v558
        %v598 = vunpack.c.l.b16 %v559
        %v599 = vpack.c.b16 %v584, %v583
        %v600 = vpack.c.b16 %v586, %v585
        %v601 = vpack.c.b16 %v588, %v587
        %v602 = vpack.c.b16 %v590, %v589
        %v603 = vpack.c.b16 %v592, %v591
        %v604 = vpack.c.b16 %v594, %v593
        %v605 = vpack.c.b16 %v596, %v595
        %v606 = vpack.c.b16 %v598, %v597
        %615 = vmatprep.subr.bf16.mxu0 0
        %616 = vmatpush1.bf16.msra.mxu0 %v606
        %617 = vmatprep.subr.bf16.mxu0 0
        %618 = vmatpush1.bf16.msra.mxu0 %v605
        %619 = vmatprep.subr.bf16.mxu0 0
        %620 = vmatpush1.bf16.msra.mxu0 %v604
        %621 = vmatprep.subr.bf16.mxu0 0
        %622 = vmatpush1.bf16.msra.mxu0 %v603
        %623 = vmatprep.subr.bf16.mxu0 0
        %624 = vmatpush1.bf16.msra.mxu0 %v602
        %625 = vmatprep.subr.bf16.mxu0 0
        %626 = vmatpush1.bf16.msra.mxu0 %v601
        %627 = vmatprep.subr.bf16.mxu0 0
        %628 = vmatpush1.bf16.msra.mxu0 %v600
        %629 = vmatprep.subr.bf16.mxu0 0
        %630 = vmatpush1.bf16.msra.mxu0 %v599
        %631 = vmatprep.subr.bf16.mxu0 0
        %632 = vmatpush2.bf16.msra.mxu0 0
        %633 = vmatprep.subr.bf16.mxu0 0
        %634 = vmatpush2.bf16.msra.mxu0 0
        %635 = vmatprep.subr.bf16.mxu0 0
        %636 = vmatpush2.bf16.msra.mxu0 0
        %637 = vmatprep.subr.bf16.mxu0 0
        %638 = vmatpush2.bf16.msra.mxu0 0
        %639 = vmatprep.subr.bf16.mxu0 0
        %640 = vmatpush2.bf16.msra.mxu0 0
        %641 = vmatprep.subr.bf16.mxu0 0
        %642 = vmatpush2.bf16.msra.mxu0 0
        %643 = vmatprep.subr.bf16.mxu0 0
        %644 = vmatpush2.bf16.msra.mxu0 0
        %645 = vmatprep.subr.bf16.mxu0 0
        %646 = vmatpush2.bf16.msra.mxu0 0
        %647 = vmatprep.mubr.bf16.mxu0 0
        %648 = vmatmul.mubr.bf16.gmra.mxu0 %v542
        %v649 = vpop.f32.mrf.mxu0
        %v650 = vadd.f32 %v565, %v649
        %v651 = vpop.f32.mrf.mxu0
        %v652 = vpop.f32.mrf.mxu0
        %v653 = vadd.f32 %v565, %v652
        %v654 = vpop.f32.mrf.mxu0
        %655 = vmatprep.mubr.bf16.mxu0 0
        %656 = vmatmul.mubr.bf16.gmra.mxu0 %v543
        %v657 = vpop.f32.mrf.mxu0
        %v658 = vadd.f32 %v565, %v657
        %v659 = vpop.f32.mrf.mxu0
        %v660 = vpop.f32.mrf.mxu0
        %v661 = vadd.f32 %v565, %v660
        %v662 = vpop.f32.mrf.mxu0
        %663 = vdwg.mxu0
        %664 = vst [vmem:[%s318] sm:$0xff] %v650
        %665 = vst [vmem:[%s318 + $0x8] sm:$0xff] %v653
        %666 = vst [vmem:[%s318 + $0x10] sm:$0xff] %v658
        %667 = vst [vmem:[%s318 + $0x18] sm:$0xff] %v661
        %v668 = vlaneseq
        %v669 = vand.u32 %v668, 127
        %vm670 = vcmp.lt.s32.totalorder %v669, 9
        %v671 = vsel %vm670, %v650, -1e+30
        %v672 = vsel %vm670, %v653, -1e+30
        %v673 = vsel %vm670, %v658, -1e+30
        %v674 = vsel %vm670, %v661, -1e+30
        %675 = vmax.xlane.f32.xlu0 %v671
        %v676 = vpop.xlane.xlu0 %675
        %677 = vmax.xlane.f32.xlu0 %v672
        %v678 = vpop.xlane.xlu0 %677
        %679 = vmax.xlane.f32.xlu0 %v673
        %v680 = vpop.xlane.xlu0 %679
        %681 = vmax.xlane.f32.xlu0 %v674
        %v682 = vpop.xlane.xlu0 %681
        %v683 = vsub.f32 %v671, %v676
        %v684 = vsub.f32 %v672, %v678
        %v685 = vsub.f32 %v673, %v680
        %v686 = vsub.f32 %v674, %v682
        %v687 = vmul.f32 %v683, 1.442695
        %v688 = vpow.pop %v687
        %v689 = vmul.f32 %v684, 1.442695
        %v690 = vpow.pop %v689
        %v691 = vmul.f32 %v685, 1.442695
        %v692 = vpow.pop %v691
        %v693 = vmul.f32 %v686, 1.442695
        %v694 = vpow.pop %v693
        %695 = vadd.xlane.f32.xlu0 %v688
        %v696 = vpop.xlane.xlu0 %695
        %697 = vadd.xlane.f32.xlu0 %v690
        %v698 = vpop.xlane.xlu0 %697
        %699 = vadd.xlane.f32.xlu0 %v692
        %v700 = vpop.xlane.xlu0 %699
        %701 = vadd.xlane.f32.xlu0 %v694
        %v702 = vpop.xlane.xlu0 %701
        %v703 = vlog2.pop %v696
        %v704 = vmul.f32 %v703, 0.6931472
        %v705 = vlog2.pop %v698
        %v706 = vmul.f32 %v705, 0.6931472
        %v707 = vlog2.pop %v700
        %v708 = vmul.f32 %v707, 0.6931472
        %v709 = vlog2.pop %v702
        %v710 = vmul.f32 %v709, 0.6931472
        %v711 = vadd.f32 %v676, %v704
        %v712 = vadd.f32 %v678, %v706
        %v713 = vadd.f32 %v680, %v708
        %v714 = vadd.f32 %v682, %v710
        %v715 = vsub.f32 %v650, %v711
        %v716 = vsub.f32 %v653, %v712
        %v717 = vsub.f32 %v658, %v713
        %v718 = vsub.f32 %v661, %v714
        %719 = vst [vmem:[%s325] sm:$0xff] %v715
        %720 = vst [vmem:[%s325 + $0x8] sm:$0xff] %v716
        %721 = vst [vmem:[%s325 + $0x10] sm:$0xff] %v717
        %722 = vst [vmem:[%s325 + $0x18] sm:$0xff] %v718
        %s723 = sand.u32 %s187, 1
        %s724 = scalar_lea.sflag [#allocation4], %s723
        %s725 = sand.u32 %s187, 1
        %s726 = smul.addr %s725, 32
        %s727 = scalar_lea.vmem [#allocation5], %s726
        %s728 = sand.u32 %s213, 1
        %s729 = scalar_lea.sflag [#allocation7], %s728
        %s730 = sand.u32 %s213, 1
        %s731 = smul.addr %s730, 32
        %s732 = scalar_lea.vmem [#allocation6], %s731
        // Predicated region
        $region53: #{tpu_custom_call.1} parent=47 // pred_check
          %p733 = pneg %p197
        $region54: #{tpu_custom_call.1} parent=47 // pred_check_branch
          %735 = sbr.rel (%p733) target = $region56
        $region55: #{tpu_custom_call.1} parent=47 // pred_region
          %s736 = smul.u32 4, %s27
          %s738 = ssub.s32 512, 512
          %739 = vsyncadd %s724, %s738
          %s740 = smul.addr %s736, 128
          %s741 = scalar_lea.hbm %s7, %s740
          %s742 = sshll.u32 %s727, 4
          %s743 = int_to_ptr.vmem [resolvable:$true] %s742
          %748 = dma.vmem_to_hbm [thread:$0]  %s743, 512, %s741, %s724, 128, 128, 8
        $region56: #{tpu_custom_call.1} parent=47 // pred_fallthru
          _
        // Predicated region
        $region57: #{tpu_custom_call.1} parent=47 // pred_check
          %p749 = pneg %p223
        $region58: #{tpu_custom_call.1} parent=47 // pred_check_branch
          %751 = sbr.rel (%p749) target = $region60
        $region59: #{tpu_custom_call.1} parent=47 // pred_region
          %s752 = smul.u32 4, %s27
          %s754 = ssub.s32 512, 512
          %755 = vsyncadd %s729, %s754
          %s756 = smul.addr %s752, 128
          %s757 = scalar_lea.hbm %s8, %s756
          %s758 = sshll.u32 %s732, 4
          %s759 = int_to_ptr.vmem [resolvable:$true] %s758
          %764 = dma.vmem_to_hbm [thread:$0]  %s759, 512, %s757, %s729, 128, 128, 8
        $region60: #{tpu_custom_call.1} parent=47 // pred_fallthru
          _
      $region48: #{tpu_custom_call.1} parent=5 // pred_fallthru
        _
      %p765 = scmp.le.s32.totalorder 2, %s22
      // Predicated region
      $region61: #{tpu_custom_call.1} parent=5 // pred_check
        %p766 = pneg %p765
      $region62: #{tpu_custom_call.1} parent=5 // pred_check_branch
        %768 = sbr.rel (%p766) target = $region64
      $region63: #{tpu_custom_call.1} parent=5 // pred_region
        %s769 = ssub.s32 %s22, 2
        // Predicated region
        $region65: #{tpu_custom_call.1} parent=63 // pred_check
          %p770 = pneg %p203
        $region66: #{tpu_custom_call.1} parent=63 // pred_check_branch
          %772 = sbr.rel (%p770) target = $region68
        $region67: #{tpu_custom_call.1} parent=63 // pred_region
          %s773 = sand.u32 %s188, 1
          %s774 = scalar_lea.sflag [#allocation4], %s773
          %s775 = sand.u32 %s188, 1
          %s776 = smul.addr %s775, 32
          %s777 = scalar_lea.vmem [#allocation5], %s776
          %778 = dma.done %s774, 512
        $region68: #{tpu_custom_call.1} parent=63 // pred_fallthru
          _
        // Predicated region
        $region69: #{tpu_custom_call.1} parent=63 // pred_check
          %p779 = pneg %p229
        $region70: #{tpu_custom_call.1} parent=63 // pred_check_branch
          %781 = sbr.rel (%p779) target = $region72
        $region71: #{tpu_custom_call.1} parent=63 // pred_region
          %s782 = sand.u32 %s214, 1
          %s783 = scalar_lea.sflag [#allocation7], %s782
          %s784 = sand.u32 %s214, 1
          %s785 = smul.addr %s784, 32
          %s786 = scalar_lea.vmem [#allocation6], %s785
          %787 = dma.done %s783, 512
        $region72: #{tpu_custom_call.1} parent=63 // pred_fallthru
          _
      $region64: #{tpu_custom_call.1} parent=5 // pred_fallthru
        _
    $region6: #{tpu_custom_call.1} parent=1 // loop_footer
      %s26 = sadd.s32 1, %s22
    $region7: #{tpu_custom_call.1} parent=1 // loop_footer_branch
      %21 = sbr.rel target = $region3
    $region8: #{tpu_custom_call.1} parent=1 // loop_exit
      _
    %788 = vsyncpa [#allocation3], 1
    %s789 = scalar_lea.sflag [#allocation3], 1
    %790 = vsyncpa %s789, 1
    %791 = vsyncpa [#allocation4], 1
    %s792 = scalar_lea.sflag [#allocation4], 1
    %793 = vsyncpa %s792, 1
    %794 = vsyncpa [#allocation7], 1
    %s795 = scalar_lea.sflag [#allocation7], 1
    %796 = vsyncpa %s795, 1

</llo_original>
